<compile_context>
chip_gen: v7x
topology: tpu7x:2x2x1
jax: 0.10.0
libtpu: 0.0.40
codegen_flags: <defaults>
</compile_context>

<pallas_src>
import functools

import jax
import jax.numpy as jnp
from jax.experimental import pallas as pl
from jax.experimental.pallas import tpu as pltpu

_LANE = 128
_SUBLANE = 8


def _round_up(v, m):
    return ((v + m - 1) // m) * m


def _chip_defaults():
    """(row_tile for f32 inputs, num_cores) per TPU generation.

    v7x: 8 MiB blocks (2 inputs x 2 bufs = 32 MiB, safely under 64 MiB VMEM), 2 TCs.
    v6e: 16 MiB blocks (128 MiB VMEM to spare), single TC.
    v5e: 8 MiB blocks already sit near the HBM roofline, single TC.
    Unknown chips get a conservative config that compiles everywhere.
    """
    try:
        kind = jax.devices()[0].device_kind.lower()
    except Exception:
        kind = ""
    if "7" in kind:
        return 16384, 2
    if "v6" in kind or "6e" in kind or "6 lite" in kind:
        return 32768, 1
    if "v5" in kind or "5e" in kind or "5 lite" in kind:
        return 16384, 1
    return 8192, 1


def _mse_partial_kernel(x_ref, t_ref, part_ref, *, rows, row_tile, steps_per_core):
    c = pl.program_id(0)   # core-split axis ("parallel")
    i = pl.program_id(1)   # reduction axis ("arbitrary")

    # Zero this core's resident (1, 8, 128) accumulator once.
    @pl.when(i == 0)
    def _():
        part_ref[...] = jnp.zeros_like(part_ref)

    # Unclamped logical block start; in_map clamps only the DMA index, the
    # compute below is gated on the unclamped range so dummy visits do nothing.
    row_start = (c * steps_per_core + i) * row_tile
    is_interior = row_start + row_tile <= rows
    is_tail = jnp.logical_and(row_start < rows, jnp.logical_not(is_interior))

    # Fast path: block fully inside the valid row range -> no iota/cmp/select
    # at all, keeping the VPU free so the kernel stays HBM-bound (matters on
    # v7x at 3.2 TB/s and for bf16 inputs on any chip).
    @pl.when(is_interior)
    def _():
        d = x_ref[...].astype(jnp.float32) - t_ref[...].astype(jnp.float32)
        part_ref[...] += jnp.sum((d * d).reshape(-1, _SUBLANE, _LANE),
                                 axis=0, keepdims=True)

    # Tail path: only the ragged last block pays for masking. A (row_tile, 1)
    # iota broadcasts against the full tile. Keep the select (NOT a multiply-
    # by-mask): the un-DMA'd part of a partial block may hold NaN/Inf garbage.
    @pl.when(is_tail)
    def _():
        d = x_ref[...].astype(jnp.float32) - t_ref[...].astype(jnp.float32)
        d2 = d * d
        row_ids = row_start + jax.lax.broadcasted_iota(jnp.int32, (row_tile, 1), 0)
        d2 = jnp.where(row_ids < rows, d2, 0.0)
        part_ref[...] += jnp.sum(d2.reshape(-1, _SUBLANE, _LANE),
                                 axis=0, keepdims=True)
    # Fully-dummy clamped visits (row_start >= rows): no compute, and because
    # in_map maps them to the previous step's block index, no re-fetch DMA.


def content_loss(x, target, *, row_tile=None, num_cores=None):
    """Pallas equivalent of ContentLoss.forward: returns (input, mse_loss)."""
    assert x.shape == target.shape, "input and target must have the same shape"
    total = x.size
    itemsize = jnp.dtype(x.dtype).itemsize

    def_row_tile, def_cores = _chip_defaults()
    if row_tile is None:
        # Keep block *bytes* roughly constant across dtypes (bf16 -> 2x rows).
        row_tile = def_row_tile * max(1, 4 // itemsize)
    if num_cores is None:
        num_cores = def_cores

    xf = x.reshape(-1)
    tf = target.reshape(-1)

    # Ragged handling without jnp.pad (which would copy both full arrays in
    # HBM): the kernel streams the 128-aligned prefix; the <128-element flat
    # tail is reduced in plain JAX (negligible work).
    main = (total // _LANE) * _LANE
    tail_sum = jnp.float32(0.0)
    if main != total:
        xt = jax.lax.slice(xf, (main,), (total,)).astype(jnp.float32)
        tt = jax.lax.slice(tf, (main,), (total,)).astype(jnp.float32)
        tail_sum = jnp.sum((xt - tt) ** 2)
        xf = jax.lax.slice(xf, (0,), (main,))
        tf = jax.lax.slice(tf, (0,), (main,))

    if main == 0:
        return x, tail_sum / jnp.float32(total)

    xf = xf.reshape(-1, _LANE)
    tf = tf.reshape(-1, _LANE)
    rows = xf.shape[0]

    # Clamp for small inputs; keep sublane (8) alignment of the block.
    row_tile = max(_SUBLANE,
                   min(_round_up(row_tile, _SUBLANE), _round_up(rows, _SUBLANE)))
    total_row_blocks = pl.cdiv(rows, row_tile)

    # Core split: 1 on single-TC chips (no dummy visits, one partial-sum slot);
    # 2 on v7x megacore. Never more cores than blocks.
    num_cores = max(1, min(num_cores, total_row_blocks))
    steps_per_core = pl.cdiv(total_row_blocks, num_cores)

    def in_map(c, i):
        # Dummy visits (only the last core, only when total_row_blocks is not
        # a multiple of num_cores) clamp onto that core's previous block index,
        # so the pipeline skips the re-fetch DMA; the kernel masks them out.
        return (jnp.minimum(c * steps_per_core + i, total_row_blocks - 1), 0)

    kernel = functools.partial(
        _mse_partial_kernel,
        rows=rows, row_tile=row_tile, steps_per_core=steps_per_core)

    block_bytes = row_tile * _LANE * itemsize
    # 2 inputs x 2 pipeline buffers, plus headroom for the tiny accumulator.
    vmem_limit = int(4 * block_bytes + (16 << 20))

    partials = pl.pallas_call(
        kernel,
        out_shape=jax.ShapeDtypeStruct((num_cores, _SUBLANE, _LANE), jnp.float32),
        grid_spec=pltpu.PrefetchScalarGridSpec(
            num_scalar_prefetch=0,
            grid=(num_cores, steps_per_core),
            in_specs=[
                pl.BlockSpec((row_tile, _LANE), in_map),
                pl.BlockSpec((row_tile, _LANE), in_map),
            ],
            out_specs=pl.BlockSpec((1, _SUBLANE, _LANE), lambda c, i: (c, 0, 0)),
        ),
        compiler_params=pltpu.CompilerParams(
            dimension_semantics=("parallel", "arbitrary"),
            vmem_limit_bytes=vmem_limit,
        ),
        cost_estimate=pl.CostEstimate(
            flops=3 * main,
            transcendentals=0,
            bytes_accessed=2 * main * itemsize + num_cores * _SUBLANE * _LANE * 4,
        ),
    )(xf, tf)

    # Note: dividing by f32(total) loses ~1e-7 relative precision for
    # total > 2^24 elements — within the module's tolerance.
    loss = (jnp.sum(partials) + tail_sum) / jnp.float32(total)

    # ContentLoss.forward returns the input unchanged; the MSE is a side value.
    return x, loss


if __name__ == "__main__":
    key = jax.random.PRNGKey(0)
    k1, k2, k3, k4 = jax.random.split(key, 4)

    # Conv-feature-map style NCHW input, as ContentLoss sees in style transfer.
    shape = (2, 4, 16, 16)
    x = jax.random.normal(k1, shape, dtype=jnp.float32)
    target = jax.random.normal(k2, shape, dtype=jnp.float32)  # "target.detach()"

    out, loss = content_loss(x, target)
    out = jax.block_until_ready(out)
    loss = jax.block_until_ready(loss)

    ref = jnp.mean((x - target) ** 2)
    assert jnp.allclose(loss, ref, rtol=1e-5, atol=1e-6), (loss, ref)
    assert jnp.array_equal(out, x)

    # Exercise the in-kernel tail-mask path, the 2-core split with a dummy
    # clamped visit, and the ragged (<128 elements) plain-JAX tail.
    shape2 = (4, 5, 131)   # 2620 elems: 20 full lane-rows + 60-element tail
    x2 = jax.random.normal(k3, shape2, dtype=jnp.float32)
    t2 = jax.random.normal(k4, shape2, dtype=jnp.float32)
    out2, loss2 = content_loss(x2, t2, row_tile=8, num_cores=2)
    loss2 = jax.block_until_ready(loss2)
    ref2 = jnp.mean((x2 - t2) ** 2)
    assert jnp.allclose(loss2, ref2, rtol=1e-5, atol=1e-6), (loss2, ref2)
    assert jnp.array_equal(jax.block_until_ready(out2), x2)

    print("KERNEL_OK")
</pallas_src>

<mosaic_0001>
module attributes {stable_mosaic.version = 11 : i64} {
  func.func @_mse_partial_kernel(%arg0: i32, %arg1: i32, %arg2: memref<16x128xf32, #tpu.memory_space<vmem>>, %arg3: memref<16x128xf32, #tpu.memory_space<vmem>>, %arg4: memref<1x8x128xf32, #tpu.memory_space<vmem>>) attributes {dimension_semantics = [#tpu.dimension_semantics<parallel>, #tpu.dimension_semantics<arbitrary>], iteration_bounds = array<i64: 1, 1>, scalar_prefetch = 0 : i64, scratch_operands = 0 : i64, tpu.core_type = #tpu.core_type<tc>, window_params = [{transform_indices = @transform_0, window_bounds = array<i64: 16, 128>}, {transform_indices = @transform_1, window_bounds = array<i64: 16, 128>}, {transform_indices = @transform_2, window_bounds = array<i64: 1, 8, 128>}]} {
    %c0_i32 = arith.constant 0 : i32
    %0 = arith.cmpi eq, %arg1, %c0_i32 : i32
    %1 = arith.extui %0 : i1 to i32
    %c0_i32_0 = arith.constant 0 : i32
    %2 = arith.cmpi ne, %1, %c0_i32_0 : i32
    scf.if %2 {
      %cst = arith.constant 0.000000e+00 : f32
      %15 = vector.broadcast %cst : f32 to vector<1x8x128xf32>
      %c0 = arith.constant 0 : index
      %c0_6 = arith.constant 0 : index
      %c0_7 = arith.constant 0 : index
      %16 = vector.load %arg4[%c0, %c0_6, %c0_7] : memref<1x8x128xf32, #tpu.memory_space<vmem>>, vector<1x8x128xf32>
      tpu.vector_store %arg4[%c0, %c0_6, %c0_7], %15 {strides = array<i32>} : memref<1x8x128xf32, #tpu.memory_space<vmem>>, vector<1x8x128xf32>,
    } else {
    }
    %c1_i32 = arith.constant 1 : i32
    %3 = arith.muli %arg0, %c1_i32 : i32
    %4 = arith.addi %3, %arg1 : i32
    %c16_i32 = arith.constant 16 : i32
    %5 = arith.muli %4, %c16_i32 : i32
    %c16_i32_1 = arith.constant 16 : i32
    %6 = arith.addi %5, %c16_i32_1 : i32
    %c16_i32_2 = arith.constant 16 : i32
    %7 = arith.cmpi sle, %6, %c16_i32_2 : i32
    %c16_i32_3 = arith.constant 16 : i32
    %8 = arith.cmpi slt, %5, %c16_i32_3 : i32
    %true = arith.constant true
    %9 = arith.xori %7, %true : i1
    %10 = arith.andi %8, %9 : i1
    %11 = arith.extui %7 : i1 to i32
    %c0_i32_4 = arith.constant 0 : i32
    %12 = arith.cmpi ne, %11, %c0_i32_4 : i32
    scf.if %12 {
      %c0 = arith.constant 0 : index
      %c0_6 = arith.constant 0 : index
      %15 = vector.load %arg2[%c0, %c0_6] : memref<16x128xf32, #tpu.memory_space<vmem>>, vector<16x128xf32>
      %c0_7 = arith.constant 0 : index
      %c0_8 = arith.constant 0 : index
      %16 = vector.load %arg3[%c0_7, %c0_8] : memref<16x128xf32, #tpu.memory_space<vmem>>, vector<16x128xf32>
      %17 = arith.subf %15, %16 : vector<16x128xf32>
      %c0_9 = arith.constant 0 : index
      %c0_10 = arith.constant 0 : index
      %c0_11 = arith.constant 0 : index
      %18 = vector.load %arg4[%c0_9, %c0_10, %c0_11] : memref<1x8x128xf32, #tpu.memory_space<vmem>>, vector<1x8x128xf32>
      %19 = arith.mulf %17, %17 : vector<16x128xf32>
      %20 = vector.shape_cast %19 : vector<16x128xf32> to vector<2x8x128xf32>
      %cst = arith.constant dense<0.000000e+00> : vector<8x128xf32>
      %21 = vector.multi_reduction <add>, %20, %cst [0] : vector<2x8x128xf32> to vector<8x128xf32>
      %22 = vector.shape_cast %21 : vector<8x128xf32> to vector<1x8x128xf32>
      %23 = arith.addf %18, %22 : vector<1x8x128xf32>
      %c0_12 = arith.constant 0 : index
      %c0_13 = arith.constant 0 : index
      %c0_14 = arith.constant 0 : index
      %24 = vector.load %arg4[%c0_12, %c0_13, %c0_14] : memref<1x8x128xf32, #tpu.memory_space<vmem>>, vector<1x8x128xf32>
      tpu.vector_store %arg4[%c0_12, %c0_13, %c0_14], %23 {strides = array<i32>} : memref<1x8x128xf32, #tpu.memory_space<vmem>>, vector<1x8x128xf32>,
    } else {
    }
    %13 = arith.extui %10 : i1 to i32
    %c0_i32_5 = arith.constant 0 : i32
    %14 = arith.cmpi ne, %13, %c0_i32_5 : i32
    scf.if %14 {
      %c0 = arith.constant 0 : index
      %c0_6 = arith.constant 0 : index
      %15 = vector.load %arg2[%c0, %c0_6] : memref<16x128xf32, #tpu.memory_space<vmem>>, vector<16x128xf32>
      %c0_7 = arith.constant 0 : index
      %c0_8 = arith.constant 0 : index
      %16 = vector.load %arg3[%c0_7, %c0_8] : memref<16x128xf32, #tpu.memory_space<vmem>>, vector<16x128xf32>
      %17 = arith.subf %15, %16 : vector<16x128xf32>
      %18 = arith.mulf %17, %17 : vector<16x128xf32>
      %19 = tpu.iota {dimensions = array<i32: 0>} : vector<16x1xi32>
      %20 = vector.broadcast %5 : i32 to vector<16x1xi32>
      %21 = arith.addi %20, %19 : vector<16x1xi32>
      %c16_i32_9 = arith.constant 16 : i32
      %22 = vector.broadcast %c16_i32_9 : i32 to vector<16x1xi32>
      %23 = arith.cmpi slt, %21, %22 : vector<16x1xi32>
      %cst = arith.constant 0.000000e+00 : f32
      %24 = vector.shape_cast %23 : vector<16x1xi1> to vector<16x1xi1>
      %25 = vector.broadcast %24 : vector<16x1xi1> to vector<16x128xi1>
      %26 = vector.broadcast %cst : f32 to vector<16x128xf32>
      %27 = arith.select %25, %18, %26 : vector<16x128xi1>, vector<16x128xf32>
      %c0_10 = arith.constant 0 : index
      %c0_11 = arith.constant 0 : index
      %c0_12 = arith.constant 0 : index
      %28 = vector.load %arg4[%c0_10, %c0_11, %c0_12] : memref<1x8x128xf32, #tpu.memory_space<vmem>>, vector<1x8x128xf32>
      %29 = vector.shape_cast %27 : vector<16x128xf32> to vector<2x8x128xf32>
      %cst_13 = arith.constant dense<0.000000e+00> : vector<8x128xf32>
      %30 = vector.multi_reduction <add>, %29, %cst_13 [0] : vector<2x8x128xf32> to vector<8x128xf32>
      %31 = vector.shape_cast %30 : vector<8x128xf32> to vector<1x8x128xf32>
      %32 = arith.addf %28, %31 : vector<1x8x128xf32>
      %c0_14 = arith.constant 0 : index
      %c0_15 = arith.constant 0 : index
      %c0_16 = arith.constant 0 : index
      %33 = vector.load %arg4[%c0_14, %c0_15, %c0_16] : memref<1x8x128xf32, #tpu.memory_space<vmem>>, vector<1x8x128xf32>
      tpu.vector_store %arg4[%c0_14, %c0_15, %c0_16], %32 {strides = array<i32>} : memref<1x8x128xf32, #tpu.memory_space<vmem>>, vector<1x8x128xf32>,
    } else {
    }
    return
  }
  func.func @transform_0(%arg0: i32, %arg1: i32) -> (i32, i32) {
    %c1_i32 = arith.constant 1 : i32
    %0 = arith.muli %arg0, %c1_i32 : i32
    %1 = arith.addi %0, %arg1 : i32
    %c0_i32 = arith.constant 0 : i32
    %2 = arith.minsi %1, %c0_i32 : i32
    %c0_i32_0 = arith.constant 0 : i32
    %c0_i32_1 = arith.constant 0 : i32
    return %2, %c0_i32_0 : i32, i32
  }
  func.func @transform_1(%arg0: i32, %arg1: i32) -> (i32, i32) {
    %c1_i32 = arith.constant 1 : i32
    %0 = arith.muli %arg0, %c1_i32 : i32
    %1 = arith.addi %0, %arg1 : i32
    %c0_i32 = arith.constant 0 : i32
    %2 = arith.minsi %1, %c0_i32 : i32
    %c0_i32_0 = arith.constant 0 : i32
    %c0_i32_1 = arith.constant 0 : i32
    return %2, %c0_i32_0 : i32, i32
  }
  func.func @transform_2(%arg0: i32, %arg1: i32) -> (i32, i32, i32) {
    %c0_i32 = arith.constant 0 : i32
    %c0_i32_0 = arith.constant 0 : i32
    %c0_i32_1 = arith.constant 0 : i32
    return %arg0, %c0_i32, %c0_i32_0 : i32, i32, i32
  }
}

</mosaic_0001>

<llo_original>
// kernel: tpu_custom_call.1
$region0: #{tpu_custom_call.1}
  #allocation0 [shape = 'u32[]', space=smem, size = 0x4, offset = 0x4, fixed_abs, tag = 'smem constant byte address 0x4 - core index']
  #allocation1 [shape = 'u32[144,128]{1,0:T(1,128)}', space=vmem, size = 0x12000, scoped, tag = 'internal scratch']
  %s0 = inlined_call_operand.hbm [shape: f32[16,128], index: 0, kind: input, shape index: {}]
  %s1 = inlined_call_operand.hbm [shape: f32[16,128], index: 1, kind: input, shape index: {}]
  %s2 = inlined_call_operand.hbm [shape: f32[1,8,128], index: 2, kind: output, shape index: {}]
  %s3 = sld [smem:[#allocation0]]
  $region38: #{tpu_custom_call.1} parent=0
    _
  %s5 = ssub.s32 1, %s3
  %s6 = scalar_select 0, %s5, %s3
  $region1: #{tpu_custom_call.1} parent=0
    #allocation2 [shape = 'u8[8192]{0}', space=vmem, size = 0x2000, scoped, tag = 'input window, operand 0, single buffered']
    #allocation3 [shape = 's32[1]{0}', space=sflag, size = 0x4, scoped, tag = 'scoped memory for tpu_custom_call.1']
    #allocation4 [shape = 's32[1]{0}', space=sflag, size = 0x4, scoped, tag = 'scoped memory for tpu_custom_call.1']
    #allocation5 [shape = 'u8[8192]{0}', space=vmem, size = 0x2000, scoped, tag = 'input window, operand 1, single buffered']
    #allocation6 [shape = 's32[1]{0}', space=sflag, size = 0x4, scoped, tag = 'scoped memory for tpu_custom_call.1']
    #allocation7 [shape = 'u8[4096]{0}', space=vmem, size = 0x1000, scoped, tag = 'output window, operand 0, single buffered']
    %7 = vsyncpa [#allocation3], 0
    %8 = vsyncpa [#allocation6], 0
    %9 = vsyncpa [#allocation4], 0
    // Predicated region
    $region2: #{tpu_custom_call.1} parent=1 // pred_check
      _
    $region3: #{tpu_custom_call.1} parent=1 // pred_check_branch
      %11 = sbr.rel (0) target = $region5
    $region4: #{tpu_custom_call.1} parent=1 // pred_region
      %s12 = sadd.s32 0, 0
      %p13 = scmp.lt.s32.totalorder %s12, 0
      %s14 = scalar_select %p13, %s12, 0
      %s15 = smul.u32 2, %s14
      %s17 = ssub.s32 256, 256
      %18 = vsyncadd [#allocation3], %s17
      %s19 = smul.addr %s15, 128
      %s20 = scalar_lea.hbm %s0, %s19
      %s21 = sshll.u32 [#allocation2], 4
      %s22 = int_to_ptr.vmem [resolvable:$true] %s21
      %27 = dma.hbm_to_vmem [thread:$0]  %s20, 256, %s22, [#allocation3], 128, 128, 8
    $region5: #{tpu_custom_call.1} parent=1 // pred_fallthru
      _
    // Predicated region
    $region6: #{tpu_custom_call.1} parent=1 // pred_check
      _
    $region7: #{tpu_custom_call.1} parent=1 // pred_check_branch
      %29 = sbr.rel (0) target = $region9
    $region8: #{tpu_custom_call.1} parent=1 // pred_region
      %s30 = sadd.s32 0, 0
      %p31 = scmp.lt.s32.totalorder %s30, 0
      %s32 = scalar_select %p31, %s30, 0
      %s33 = smul.u32 2, %s32
      %s35 = ssub.s32 256, 256
      %36 = vsyncadd [#allocation6], %s35
      %s37 = smul.addr %s33, 128
      %s38 = scalar_lea.hbm %s1, %s37
      %s39 = sshll.u32 [#allocation5], 4
      %s40 = int_to_ptr.vmem [resolvable:$true] %s39
      %45 = dma.hbm_to_vmem [thread:$0]  %s38, 256, %s40, [#allocation6], 128, 128, 8
    $region9: #{tpu_custom_call.1} parent=1 // pred_fallthru
      _
    // Predicated region
    $region10: #{tpu_custom_call.1} parent=1 // pred_check
      _
    $region11: #{tpu_custom_call.1} parent=1 // pred_check_branch
      %47 = sbr.rel (0) target = $region13
    $region12: #{tpu_custom_call.1} parent=1 // pred_region
      %48 = dma.done [#allocation3], 256
    $region13: #{tpu_custom_call.1} parent=1 // pred_fallthru
      _
    // Predicated region
    $region14: #{tpu_custom_call.1} parent=1 // pred_check
      _
    $region15: #{tpu_custom_call.1} parent=1 // pred_check_branch
      %50 = sbr.rel (0) target = $region17
    $region16: #{tpu_custom_call.1} parent=1 // pred_region
      %51 = dma.done [#allocation6], 256
    $region17: #{tpu_custom_call.1} parent=1 // pred_fallthru
      _
    %s52 = sadd.s32 0, 0
    %p53 = scmp.lt.s32.totalorder %s52, 0
    %s54 = scalar_select %p53, %s52, 0
    %s55 = smul.u32 2, %s54
    %s56 = sadd.s32 0, 0
    %p57 = scmp.lt.s32.totalorder %s56, 0
    %s58 = scalar_select %p57, %s56, 0
    %s59 = smul.u32 2, %s58
    %p60 = scmp.eq.s32.totalorder 0, 0
    // Predicated region
    $region18: #{tpu_custom_call.1} parent=1 // pred_check
      %p61 = pneg %p60
    $region19: #{tpu_custom_call.1} parent=1 // pred_check_branch
      %63 = sbr.rel (%p61) target = $region21
    $region20: #{tpu_custom_call.1} parent=1 // pred_region
      %64 = vst [vmem:[#allocation7] sm:$0xff] 0.0
    $region21: #{tpu_custom_call.1} parent=1 // pred_fallthru
      _
    %s65 = sadd.s32 0, 0
    %s66 = smul.u32 %s65, 16
    %s67 = sadd.s32 %s66, 16
    %p68 = scmp.le.s32.totalorder %s67, 16
    %p69 = scmp.lt.s32.totalorder %s66, 16
    %p70 = scmp.gt.s32.totalorder %s67, 16
    %p71 = pnand %p69, %p70
    %p72 = pneg %p71
    // Predicated region
    $region22: #{tpu_custom_call.1} parent=1 // pred_check
      %p73 = pneg %p68
    $region23: #{tpu_custom_call.1} parent=1 // pred_check_branch
      %75 = sbr.rel (%p73) target = $region25
    $region24: #{tpu_custom_call.1} parent=1 // pred_region
      %v76 = vld [vmem:[#allocation2] sm:$0xff]
      %v77 = vld [vmem:[#allocation2 + $0x8] sm:$0xff]
      %v78 = vld [vmem:[#allocation5] sm:$0xff]
      %v79 = vld [vmem:[#allocation5 + $0x8] sm:$0xff]
      %v80 = vsub.f32 %v76, %v78
      %v81 = vsub.f32 %v77, %v79
      %v82 = vld [vmem:[#allocation7] sm:$0xff]
      %v83 = vmul.f32 %v80, %v80
      %v84 = vmul.f32 %v81, %v81
      %v85 = vadd.f32 %v83, %v84
      %v86 = vadd.f32 %v82, %v85
      %87 = vst [vmem:[#allocation7] sm:$0xff] %v86
    $region25: #{tpu_custom_call.1} parent=1 // pred_fallthru
      _
    // Predicated region
    $region26: #{tpu_custom_call.1} parent=1 // pred_check
      _
    $region27: #{tpu_custom_call.1} parent=1 // pred_check_branch
      %89 = sbr.rel (%p71) target = $region29
    $region28: #{tpu_custom_call.1} parent=1 // pred_region
      %v90 = vld [vmem:[#allocation2] sm:$0xff]
      %v91 = vld [vmem:[#allocation2 + $0x8] sm:$0xff]
      %v92 = vld [vmem:[#allocation5] sm:$0xff]
      %v93 = vld [vmem:[#allocation5 + $0x8] sm:$0xff]
      %v94 = vsub.f32 %v90, %v92
      %v95 = vsub.f32 %v91, %v93
      %v96 = vmul.f32 %v94, %v94
      %v97 = vmul.f32 %v95, %v95
      %v98 = vlaneseq
      %v99 = vshrl.u32 %v98, 7
      %v100 = vadd.s32 %v99, 8
      %v101 = vstv %s66
      %v102 = vadd.s32 %v101, %v99
      %v103 = vadd.s32 %v101, %v100
      %vm104 = vcmp.lt.s32.totalorder %v102, 16
      %vm105 = vcmp.lt.s32.totalorder %v103, 16
      %v106 = vsel %vm104, 1, 0
      %v107 = vsel %vm105, 1, 0
      %vm108 = vcmp.eq.s32.totalorder %v106, 1
      %vm109 = vcmp.eq.s32.totalorder %v107, 1
      %v110 = vsel %vm108, %v96, 0.0
      %v111 = vsel %vm109, %v97, 0.0
      %v112 = vld [vmem:[#allocation7] sm:$0xff]
      %v113 = vadd.f32 %v110, %v111
      %v114 = vadd.f32 %v112, %v113
      %115 = vst [vmem:[#allocation7] sm:$0xff] %v114
    $region29: #{tpu_custom_call.1} parent=1 // pred_fallthru
      _
    // Predicated region
    $region30: #{tpu_custom_call.1} parent=1 // pred_check
      _
    $region31: #{tpu_custom_call.1} parent=1 // pred_check_branch
      %117 = sbr.rel (0) target = $region33
    $region32: #{tpu_custom_call.1} parent=1 // pred_region
      %s119 = ssub.s32 128, 128
      %120 = vsyncadd [#allocation4], %s119
      %s122 = sshll.u32 [#allocation7], 4
      %s123 = int_to_ptr.vmem [resolvable:$true] %s122
      %125 = dma.vmem_to_hbm [thread:$0]  %s123, 128, %s2, [#allocation4]
    $region33: #{tpu_custom_call.1} parent=1 // pred_fallthru
      _
    // Predicated region
    $region34: #{tpu_custom_call.1} parent=1 // pred_check
      _
    $region35: #{tpu_custom_call.1} parent=1 // pred_check_branch
      %127 = sbr.rel (0) target = $region37
    $region36: #{tpu_custom_call.1} parent=1 // pred_region
      %128 = dma.done [#allocation4], 128
    $region37: #{tpu_custom_call.1} parent=1 // pred_fallthru
      _
    %129 = vsyncpa [#allocation3], 1
    %130 = vsyncpa [#allocation6], 1
    %131 = vsyncpa [#allocation4], 1

</llo_original>
